<compile_context>
chip_gen: v6e
topology: v6e:2x2x1
jax: 0.10.0
libtpu: 0.0.40
codegen_flags: <defaults>
</compile_context>

<pallas_src>
import jax
import jax.numpy as jnp
from jax.experimental import pallas as pl
from jax.experimental.pallas import tpu as pltpu


def make_mlp_kernel(compute_dtype):
    def mlp_kernel(x_ref, w1t_ref, b1_ref, w2t_ref, b2_ref, o_ref):
        # x_ref:   (TB, 10)   w1t_ref: (10, 20)   b1_ref: (1, 20)
        # w2t_ref: (20, 5)    b2_ref:  (1, 5)     o_ref:  (TB, 5)
        x = x_ref[...]
        w1t = w1t_ref[...]
        w2t = w2t_ref[...]
        if compute_dtype is not None:
            x = x.astype(compute_dtype)
        # fc1 + ReLU (MXU matmul, f32 accumulation; biases stay f32).
        h = jnp.dot(x, w1t, preferred_element_type=jnp.float32) + b1_ref[...]
        h = jnp.maximum(h, 0.0)
        if compute_dtype is not None:
            h = h.astype(compute_dtype)
        # fc2
        y = jnp.dot(h, w2t, preferred_element_type=jnp.float32) + b2_ref[...]
        o_ref[...] = y.astype(o_ref.dtype)
    return mlp_kernel


def _round_up(n, m):
    return ((n + m - 1) // m) * m


def _pick_batch_tile(B, block_b):
    """Choose a batch tile that respects the (8,128) sublane constraint."""
    # Force the cap to a multiple of 8 regardless of the user-supplied value.
    tb_cap = max(8, (min(block_b, 8192) // 8) * 8)
    if B <= 8:
        return B                      # single full-extent block (legal even if < 8 rows)
    if B <= tb_cap:
        # Whole batch fits in one tile: split into 2 grid steps so a v7x megacore
        # ("parallel" axis) can use both TensorCores. No effect on v5e/v6e.
        half = -(-B // 2)             # ceil(B / 2)
        return max(8, _round_up(half, 8))
    return tb_cap


def simple_model_forward(x, w1, b1, w2, b2, *, block_b=4096, compute_dtype=None):
    """x: (B, 10); w1: (20, 10); b1: (20,); w2: (5, 20); b2: (5,)."""
    B, in_f = x.shape
    hid = w1.shape[0]
    out_f = w2.shape[0]
    out_dtype = x.dtype

    # One-time layout prep in the wrapper (cheap XLA ops, not per-grid-step work).
    w1t = w1.T                      # (10, 20)
    w2t = w2.T                      # (20, 5)
    if compute_dtype is not None:
        w1t = w1t.astype(compute_dtype)
        w2t = w2t.astype(compute_dtype)
    b1_2d = b1.reshape(1, hid).astype(jnp.float32)      # (1, 20)
    b2_2d = b2.reshape(1, out_f).astype(jnp.float32)    # (1, 5)

    TB = _pick_batch_tile(B, block_b)
    grid = (pl.cdiv(B, TB),)        # partial last block is masked by Pallas; no padding copy

    # Advisory cost estimate so XLA can schedule around this mem-bound custom call.
    bytes_accessed = (
        x.size * x.dtype.itemsize
        + B * out_f * jnp.dtype(out_dtype).itemsize
        + w1t.size * w1t.dtype.itemsize
        + w2t.size * w2t.dtype.itemsize
        + b1_2d.size * b1_2d.dtype.itemsize
        + b2_2d.size * b2_2d.dtype.itemsize
    )
    cost = pl.CostEstimate(
        flops=2 * B * (in_f * hid + hid * out_f),
        transcendentals=0,
        bytes_accessed=bytes_accessed,
    )

    out = pl.pallas_call(
        make_mlp_kernel(compute_dtype),
        out_shape=jax.ShapeDtypeStruct((B, out_f), out_dtype),
        grid=grid,
        in_specs=[
            pl.BlockSpec((TB, in_f), lambda i: (i, 0)),      # x tile, pipelined
            pl.BlockSpec((in_f, hid), lambda i: (0, 0)),     # W1t VMEM-resident
            pl.BlockSpec((1, hid), lambda i: (0, 0)),        # b1 VMEM-resident
            pl.BlockSpec((hid, out_f), lambda i: (0, 0)),    # W2t VMEM-resident
            pl.BlockSpec((1, out_f), lambda i: (0, 0)),      # b2 VMEM-resident
        ],
        out_specs=pl.BlockSpec((TB, out_f), lambda i: (i, 0)),
        compiler_params=pltpu.CompilerParams(
            dimension_semantics=("parallel",),               # megacore sharding on v7x
            vmem_limit_bytes=32 * 1024 * 1024,               # safe on v5e/v6e/v7x
        ),
        cost_estimate=cost,
    )(x, w1t, b1_2d, w2t, b2_2d)

    return out


def init_params(key):
    # Deterministic init mimicking nn.Linear's default U(-1/sqrt(fan_in), 1/sqrt(fan_in)).
    k1, k2, k3, k4 = jax.random.split(key, 4)
    bound1 = 1.0 / jnp.sqrt(10.0)
    bound2 = 1.0 / jnp.sqrt(20.0)
    w1 = jax.random.uniform(k1, (20, 10), jnp.float32, -bound1, bound1)
    b1 = jax.random.uniform(k2, (20,), jnp.float32, -bound1, bound1)
    w2 = jax.random.uniform(k3, (5, 20), jnp.float32, -bound2, bound2)
    b2 = jax.random.uniform(k4, (5,), jnp.float32, -bound2, bound2)
    return w1, b1, w2, b2


def _reference(x, w1, b1, w2, b2):
    return jnp.maximum(x @ w1.T + b1, 0.0) @ w2.T + b2


if __name__ == "__main__":
    key = jax.random.PRNGKey(0)
    k_x, k_x2, k_p = jax.random.split(key, 3)
    w1, b1, w2, b2 = init_params(k_p)

    # Single-tile case (batch=8, grid=1).
    x = jax.random.normal(k_x, (8, 10), jnp.float32)
    out = jax.block_until_ready(simple_model_forward(x, w1, b1, w2, b2))
    ref = _reference(x, w1, b1, w2, b2)
    assert out.shape == (8, 5)
    assert jnp.allclose(out, ref, atol=1e-5), "mismatch vs reference (batch=8)"

    # Multi-tile + masked partial last block, no padding copies (batch=20, TB=8 -> grid=3).
    x2 = jax.random.normal(k_x2, (20, 10), jnp.float32)
    out2 = jax.block_until_ready(simple_model_forward(x2, w1, b1, w2, b2, block_b=8))
    ref2 = _reference(x2, w1, b1, w2, b2)
    assert out2.shape == (20, 5)
    assert jnp.allclose(out2, ref2, atol=1e-5), "mismatch vs reference (batch=20, tiled)"

    # Default block_b path: single-tile batch split into 2 grid steps (megacore) with a
    # masked partial last block (TB=16, grid=2).
    out3 = jax.block_until_ready(simple_model_forward(x2, w1, b1, w2, b2))
    assert out3.shape == (20, 5)
    assert jnp.allclose(out3, ref2, atol=1e-5), "mismatch vs reference (batch=20, split)"

    # Optional bf16-MXU path (f32 accumulation); loose tolerance for bf16 rounding.
    out4 = jax.block_until_ready(
        simple_model_forward(x, w1, b1, w2, b2, compute_dtype=jnp.bfloat16))
    assert out4.shape == (8, 5)
    assert jnp.allclose(out4, ref, atol=1e-1, rtol=1e-1), "mismatch vs reference (bf16)"

    print("KERNEL_OK")
</pallas_src>

<mosaic_0001>
module attributes {stable_mosaic.version = 11 : i64} {
  func.func @mlp_kernel(%arg0: i32, %arg1: memref<8x10xf32, #tpu.memory_space<vmem>>, %arg2: memref<10x20xf32, #tpu.memory_space<vmem>>, %arg3: memref<1x20xf32, #tpu.memory_space<vmem>>, %arg4: memref<20x5xf32, #tpu.memory_space<vmem>>, %arg5: memref<1x5xf32, #tpu.memory_space<vmem>>, %arg6: memref<8x5xf32, #tpu.memory_space<vmem>>) attributes {dimension_semantics = [#tpu.dimension_semantics<parallel>], iteration_bounds = array<i64: 1>, scalar_prefetch = 0 : i64, scratch_operands = 0 : i64, tpu.core_type = #tpu.core_type<tc>, window_params = [{transform_indices = @transform_0, window_bounds = array<i64: 8, 10>}, {pipeline_mode = #tpu.pipeline_mode<synchronous>, transform_indices = @transform_1, window_bounds = array<i64: 10, 20>}, {pipeline_mode = #tpu.pipeline_mode<synchronous>, transform_indices = @transform_2, window_bounds = array<i64: 1, 20>}, {pipeline_mode = #tpu.pipeline_mode<synchronous>, transform_indices = @transform_3, window_bounds = array<i64: 20, 5>}, {pipeline_mode = #tpu.pipeline_mode<synchronous>, transform_indices = @transform_4, window_bounds = array<i64: 1, 5>}, {transform_indices = @transform_5, window_bounds = array<i64: 8, 5>}]} {
    %c0 = arith.constant 0 : index
    %c0_0 = arith.constant 0 : index
    %0 = vector.load %arg1[%c0, %c0_0] : memref<8x10xf32, #tpu.memory_space<vmem>>, vector<8x10xf32>
    %c0_1 = arith.constant 0 : index
    %c0_2 = arith.constant 0 : index
    %1 = vector.load %arg2[%c0_1, %c0_2] : memref<10x20xf32, #tpu.memory_space<vmem>>, vector<10x20xf32>
    %c0_3 = arith.constant 0 : index
    %c0_4 = arith.constant 0 : index
    %2 = vector.load %arg4[%c0_3, %c0_4] : memref<20x5xf32, #tpu.memory_space<vmem>>, vector<20x5xf32>
    %cst = arith.constant dense<0.000000e+00> : vector<8x20xf32>
    %3 = tpu.matmul %0, %1, %cst {dimension_numbers = #tpu.dot_dimension_numbers<[1], [0], [0], [1], [0, 0, 1, 1], [], []>} : vector<8x10xf32>, vector<10x20xf32>, vector<8x20xf32> -> vector<8x20xf32>
    %c0_5 = arith.constant 0 : index
    %c0_6 = arith.constant 0 : index
    %4 = vector.load %arg3[%c0_5, %c0_6] : memref<1x20xf32, #tpu.memory_space<vmem>>, vector<1x20xf32>
    %5 = vector.broadcast %4 : vector<1x20xf32> to vector<8x20xf32>
    %6 = arith.addf %3, %5 : vector<8x20xf32>
    %cst_7 = arith.constant 0.000000e+00 : f32
    %7 = vector.broadcast %cst_7 : f32 to vector<8x20xf32>
    %8 = arith.maximumf %6, %7 : vector<8x20xf32>
    %cst_8 = arith.constant dense<0.000000e+00> : vector<8x5xf32>
    %9 = tpu.matmul %8, %2, %cst_8 {dimension_numbers = #tpu.dot_dimension_numbers<[1], [0], [0], [1], [0, 0, 1, 1], [], []>} : vector<8x20xf32>, vector<20x5xf32>, vector<8x5xf32> -> vector<8x5xf32>
    %c0_9 = arith.constant 0 : index
    %c0_10 = arith.constant 0 : index
    %10 = vector.load %arg5[%c0_9, %c0_10] : memref<1x5xf32, #tpu.memory_space<vmem>>, vector<1x5xf32>
    %11 = vector.broadcast %10 : vector<1x5xf32> to vector<8x5xf32>
    %12 = arith.addf %9, %11 : vector<8x5xf32>
    %c0_11 = arith.constant 0 : index
    %c0_12 = arith.constant 0 : index
    %13 = vector.load %arg6[%c0_11, %c0_12] : memref<8x5xf32, #tpu.memory_space<vmem>>, vector<8x5xf32>
    tpu.vector_store %arg6[%c0_11, %c0_12], %12 {strides = array<i32>} : memref<8x5xf32, #tpu.memory_space<vmem>>, vector<8x5xf32>,
    return
  }
  func.func @transform_0(%arg0: i32) -> (i32, i32) {
    %c0_i32 = arith.constant 0 : i32
    %c0_i32_0 = arith.constant 0 : i32
    return %arg0, %c0_i32 : i32, i32
  }
  func.func @transform_1(%arg0: i32) -> (i32, i32) {
    %c0_i32 = arith.constant 0 : i32
    %c0_i32_0 = arith.constant 0 : i32
    %c0_i32_1 = arith.constant 0 : i32
    return %c0_i32, %c0_i32_0 : i32, i32
  }
  func.func @transform_2(%arg0: i32) -> (i32, i32) {
    %c0_i32 = arith.constant 0 : i32
    %c0_i32_0 = arith.constant 0 : i32
    %c0_i32_1 = arith.constant 0 : i32
    return %c0_i32, %c0_i32_0 : i32, i32
  }
  func.func @transform_3(%arg0: i32) -> (i32, i32) {
    %c0_i32 = arith.constant 0 : i32
    %c0_i32_0 = arith.constant 0 : i32
    %c0_i32_1 = arith.constant 0 : i32
    return %c0_i32, %c0_i32_0 : i32, i32
  }
  func.func @transform_4(%arg0: i32) -> (i32, i32) {
    %c0_i32 = arith.constant 0 : i32
    %c0_i32_0 = arith.constant 0 : i32
    %c0_i32_1 = arith.constant 0 : i32
    return %c0_i32, %c0_i32_0 : i32, i32
  }
  func.func @transform_5(%arg0: i32) -> (i32, i32) {
    %c0_i32 = arith.constant 0 : i32
    %c0_i32_0 = arith.constant 0 : i32
    return %arg0, %c0_i32 : i32, i32
  }
}

</mosaic_0001>

<llo_original>
// kernel: tpu_custom_call.1
$region0: #{tpu_custom_call.1}
  #allocation0 [shape = 'u32[]', space=smem, size = 0x4, offset = 0x4, fixed_abs, tag = 'smem constant byte address 0x4 - core index']
  #allocation1 [shape = 'u32[144,128]{1,0:T(1,128)}', space=vmem, size = 0x12000, scoped, tag = 'internal scratch']
  %s0 = inlined_call_operand.vmem [shape: f32[8,10], index: 0, kind: input, shape index: {}]
  %s1 = inlined_call_operand.vmem [shape: f32[10,20], index: 1, kind: input, shape index: {}]
  %s2 = inlined_call_operand.vmem [shape: f32[1,20], index: 2, kind: input, shape index: {}]
  %s3 = inlined_call_operand.vmem [shape: f32[20,5], index: 3, kind: input, shape index: {}]
  %s4 = inlined_call_operand.vmem [shape: f32[1,5], index: 4, kind: input, shape index: {}]
  %s5 = inlined_call_operand.hbm [shape: f32[8,5], index: 5, kind: output, shape index: {}]
  %s6 = sld [smem:[#allocation0]]
  $region30: #{tpu_custom_call.1} parent=0
    _
  %s8 = ssub.s32 1, %s6
  %s9 = scalar_select 0, %s8, %s6
  $region1: #{tpu_custom_call.1} parent=0
    #allocation2 [shape = 'u8[4096]{0}', space=vmem, size = 0x1000, scoped, tag = 'output window, operand 0, single buffered']
    #allocation3 [shape = 's32[1]{0}', space=sflag, size = 0x4, scoped, tag = 'scoped memory for tpu_custom_call.1']
    %10 = vsyncpa [#allocation3], 0
    // Predicated region
    $region2: #{tpu_custom_call.1} parent=1 // pred_check
      _
    $region3: #{tpu_custom_call.1} parent=1 // pred_check_branch
      %12 = sbr.rel (0) target = $region5
    $region4: #{tpu_custom_call.1} parent=1 // pred_region
      _
    $region5: #{tpu_custom_call.1} parent=1 // pred_fallthru
      _
    // Predicated region
    $region6: #{tpu_custom_call.1} parent=1 // pred_check
      _
    $region7: #{tpu_custom_call.1} parent=1 // pred_check_branch
      %14 = sbr.rel (0) target = $region9
    $region8: #{tpu_custom_call.1} parent=1 // pred_region
      _
    $region9: #{tpu_custom_call.1} parent=1 // pred_fallthru
      _
    // Predicated region
    $region10: #{tpu_custom_call.1} parent=1 // pred_check
      _
    $region11: #{tpu_custom_call.1} parent=1 // pred_check_branch
      %16 = sbr.rel (0) target = $region13
    $region12: #{tpu_custom_call.1} parent=1 // pred_region
      _
    $region13: #{tpu_custom_call.1} parent=1 // pred_fallthru
      _
    // Predicated region
    $region14: #{tpu_custom_call.1} parent=1 // pred_check
      _
    $region15: #{tpu_custom_call.1} parent=1 // pred_check_branch
      %18 = sbr.rel (0) target = $region17
    $region16: #{tpu_custom_call.1} parent=1 // pred_region
      _
    $region17: #{tpu_custom_call.1} parent=1 // pred_fallthru
      _
    // Predicated region
    $region18: #{tpu_custom_call.1} parent=1 // pred_check
      _
    $region19: #{tpu_custom_call.1} parent=1 // pred_check_branch
      %20 = sbr.rel (0) target = $region21
    $region20: #{tpu_custom_call.1} parent=1 // pred_region
      _
    $region21: #{tpu_custom_call.1} parent=1 // pred_fallthru
      _
    %v21 = vld [vmem:[%s0] sm:$0xff]
    %v22 = vld [vmem:[%s1] sm:$0xff]
    %v23 = vld [vmem:[%s1 + $0x8] sm:$0x3]
    %v24 = vld [vmem:[%s3] sm:$0xff]
    %v25 = vld [vmem:[%s3 + $0x8] sm:$0xff]
    %v26 = vld [vmem:[%s3 + $0x10] sm:$0xf]
    %v27 = vld [vmem:[%s2] sm:$0x1]
    %v29 = vlaneseq
    %v30 = vshrl.u32 %v29, 7
    %v31 = vsub.s32 0, %v30
    %v32 = vrot.slane %v27, %v31
    %vm34 = vcmask 80896
    %v36 = vsel %vm34, %v21, 0
    %vm38 = vcmask 1041408
    %v40 = vsel %vm38, %v23, 0
    %42 = vmatprep.subr.mxu0 0.0
    %43 = vmatpush1.msra.mxu0 0.0
    %44 = vmatprep.subr.mxu0 0.0
    %45 = vmatpush1.msra.mxu0 0.0
    %46 = vmatprep.subr.mxu0 0.0
    %47 = vmatpush1.msra.mxu0 0.0
    %48 = vmatprep.subr.mxu0 0.0
    %49 = vmatpush1.msra.mxu0 0.0
    %50 = vmatprep.subr.mxu0 0.0
    %51 = vmatpush1.msra.mxu0 0.0
    %52 = vmatprep.subr.mxu0 0.0
    %53 = vmatpush1.msra.mxu0 0.0
    %54 = vmatprep.subr.mxu0 0.0
    %55 = vmatpush1.msra.mxu0 0.0
    %56 = vmatprep.subr.mxu0 0.0
    %57 = vmatpush1.msra.mxu0 0.0
    %58 = vmatprep.subr.mxu0 0.0
    %59 = vmatpush1.msra.mxu0 0.0
    %60 = vmatprep.subr.mxu0 0.0
    %61 = vmatpush1.msra.mxu0 0.0
    %62 = vmatprep.subr.mxu0 0.0
    %63 = vmatpush1.msra.mxu0 0.0
    %64 = vmatprep.subr.mxu0 0.0
    %65 = vmatpush1.msra.mxu0 0.0
    %66 = vmatprep.subr.mxu0 0.0
    %67 = vmatpush1.msra.mxu0 0.0
    %68 = vmatprep.subr.mxu0 0.0
    %69 = vmatpush1.msra.mxu0 0.0
    %70 = vmatprep.subr.mxu0 0.0
    %71 = vmatpush1.msra.mxu0 %v40
    %72 = vmatprep.subr.mxu0 0.0
    %73 = vmatpush1.msra.mxu0 %v22
    %74 = vmatprep.subr.mxu0 0.0
    %75 = vmatpush2.msra.mxu0 0.0
    %76 = vmatprep.subr.mxu0 0.0
    %77 = vmatpush2.msra.mxu0 0.0
    %78 = vmatprep.subr.mxu0 0.0
    %79 = vmatpush2.msra.mxu0 0.0
    %80 = vmatprep.subr.mxu0 0.0
    %81 = vmatpush2.msra.mxu0 0.0
    %82 = vmatprep.subr.mxu0 0.0
    %83 = vmatpush2.msra.mxu0 0.0
    %84 = vmatprep.subr.mxu0 0.0
    %85 = vmatpush2.msra.mxu0 0.0
    %86 = vmatprep.subr.mxu0 0.0
    %87 = vmatpush2.msra.mxu0 0.0
    %88 = vmatprep.subr.mxu0 0.0
    %89 = vmatpush2.msra.mxu0 0.0
    %90 = vmatprep.subr.mxu0 0.0
    %91 = vmatpush2.msra.mxu0 0.0
    %92 = vmatprep.subr.mxu0 0.0
    %93 = vmatpush2.msra.mxu0 0.0
    %94 = vmatprep.subr.mxu0 0.0
    %95 = vmatpush2.msra.mxu0 0.0
    %96 = vmatprep.subr.mxu0 0.0
    %97 = vmatpush2.msra.mxu0 0.0
    %98 = vmatprep.subr.mxu0 0.0
    %99 = vmatpush2.msra.mxu0 0.0
    %100 = vmatprep.subr.mxu0 0.0
    %101 = vmatpush2.msra.mxu0 0.0
    %102 = vmatprep.subr.mxu0 0.0
    %103 = vmatpush2.msra.mxu0 0.0
    %104 = vmatprep.subr.mxu0 0.0
    %105 = vmatpush2.msra.mxu0 0.0
    %106 = vmatprep.mubr.f32.mxu0 0.0
    %107 = vmatmul.mubr.f32.gmra.mxu0 %v36
    %v108 = vpop.f32.mrf.mxu0
    %v109 = vadd.f32 %v32, %v108
    %v110 = vpop.f32.mrf.mxu0
    %111 = vdwg.mxu0
    %v112 = vmax.f32 %v109, 0.0
    %v113 = vld [vmem:[%s4] sm:$0x1]
    %v115 = vlaneseq
    %v116 = vshrl.u32 %v115, 7
    %v117 = vsub.s32 0, %v116
    %v118 = vrot.slane %v113, %v117
    %vm120 = vcmask 162816
    %v122 = vsel %vm120, %v112, 0
    %vm124 = vcmask 1043456
    %v126 = vsel %vm124, %v26, 0
    %128 = vmatprep.subr.mxu0 0.0
    %129 = vmatpush1.msra.mxu0 0.0
    %130 = vmatprep.subr.mxu0 0.0
    %131 = vmatpush1.msra.mxu0 0.0
    %132 = vmatprep.subr.mxu0 0.0
    %133 = vmatpush1.msra.mxu0 0.0
    %134 = vmatprep.subr.mxu0 0.0
    %135 = vmatpush1.msra.mxu0 0.0
    %136 = vmatprep.subr.mxu0 0.0
    %137 = vmatpush1.msra.mxu0 0.0
    %138 = vmatprep.subr.mxu0 0.0
    %139 = vmatpush1.msra.mxu0 0.0
    %140 = vmatprep.subr.mxu0 0.0
    %141 = vmatpush1.msra.mxu0 0.0
    %142 = vmatprep.subr.mxu0 0.0
    %143 = vmatpush1.msra.mxu0 0.0
    %144 = vmatprep.subr.mxu0 0.0
    %145 = vmatpush1.msra.mxu0 0.0
    %146 = vmatprep.subr.mxu0 0.0
    %147 = vmatpush1.msra.mxu0 0.0
    %148 = vmatprep.subr.mxu0 0.0
    %149 = vmatpush1.msra.mxu0 0.0
    %150 = vmatprep.subr.mxu0 0.0
    %151 = vmatpush1.msra.mxu0 0.0
    %152 = vmatprep.subr.mxu0 0.0
    %153 = vmatpush1.msra.mxu0 0.0
    %154 = vmatprep.subr.mxu0 0.0
    %155 = vmatpush1.msra.mxu0 %v126
    %156 = vmatprep.subr.mxu0 0.0
    %157 = vmatpush1.msra.mxu0 %v25
    %158 = vmatprep.subr.mxu0 0.0
    %159 = vmatpush1.msra.mxu0 %v24
    %160 = vmatprep.subr.mxu0 0.0
    %161 = vmatpush2.msra.mxu0 0.0
    %162 = vmatprep.subr.mxu0 0.0
    %163 = vmatpush2.msra.mxu0 0.0
    %164 = vmatprep.subr.mxu0 0.0
    %165 = vmatpush2.msra.mxu0 0.0
    %166 = vmatprep.subr.mxu0 0.0
    %167 = vmatpush2.msra.mxu0 0.0
    %168 = vmatprep.subr.mxu0 0.0
    %169 = vmatpush2.msra.mxu0 0.0
    %170 = vmatprep.subr.mxu0 0.0
    %171 = vmatpush2.msra.mxu0 0.0
    %172 = vmatprep.subr.mxu0 0.0
    %173 = vmatpush2.msra.mxu0 0.0
    %174 = vmatprep.subr.mxu0 0.0
    %175 = vmatpush2.msra.mxu0 0.0
    %176 = vmatprep.subr.mxu0 0.0
    %177 = vmatpush2.msra.mxu0 0.0
    %178 = vmatprep.subr.mxu0 0.0
    %179 = vmatpush2.msra.mxu0 0.0
    %180 = vmatprep.subr.mxu0 0.0
    %181 = vmatpush2.msra.mxu0 0.0
    %182 = vmatprep.subr.mxu0 0.0
    %183 = vmatpush2.msra.mxu0 0.0
    %184 = vmatprep.subr.mxu0 0.0
    %185 = vmatpush2.msra.mxu0 0.0
    %186 = vmatprep.subr.mxu0 0.0
    %187 = vmatpush2.msra.mxu0 0.0
    %188 = vmatprep.subr.mxu0 0.0
    %189 = vmatpush2.msra.mxu0 0.0
    %190 = vmatprep.subr.mxu0 0.0
    %191 = vmatpush2.msra.mxu0 0.0
    %192 = vmatprep.mubr.f32.mxu0 0.0
    %193 = vmatmul.mubr.f32.gmra.mxu0 %v122
    %v194 = vpop.f32.mrf.mxu0
    %v195 = vadd.f32 %v118, %v194
    %v196 = vpop.f32.mrf.mxu0
    %197 = vdwg.mxu0
    %vm198 = vcmask 39936
    %199 = vst.msk [vmem:[#allocation2] sm:$0xff] %vm198, %v195
    // Predicated region
    $region22: #{tpu_custom_call.1} parent=1 // pred_check
      _
    $region23: #{tpu_custom_call.1} parent=1 // pred_check_branch
      %201 = sbr.rel (0) target = $region25
    $region24: #{tpu_custom_call.1} parent=1 // pred_region
      %s203 = ssub.s32 128, 128
      %204 = vsyncadd [#allocation3], %s203
      %s206 = sshll.u32 [#allocation2], 4
      %s207 = int_to_ptr.vmem [resolvable:$true] %s206
      %209 = dma.vmem_to_hbm [thread:$0]  %s207, 128, %s5, [#allocation3]
    $region25: #{tpu_custom_call.1} parent=1 // pred_fallthru
      _
    // Predicated region
    $region26: #{tpu_custom_call.1} parent=1 // pred_check
      _
    $region27: #{tpu_custom_call.1} parent=1 // pred_check_branch
      %211 = sbr.rel (0) target = $region29
    $region28: #{tpu_custom_call.1} parent=1 // pred_region
      %212 = dma.done [#allocation3], 128
    $region29: #{tpu_custom_call.1} parent=1 // pred_fallthru
      _
    %213 = vsyncpa [#allocation3], 1

</llo_original>
